<compile_context>
chip_gen: v7x
topology: tpu7x:2x2x1
jax: 0.10.0
libtpu: 0.0.40
codegen_flags: <defaults>
</compile_context>

<pallas_src>
import functools
import math

import numpy as np

import jax
import jax.numpy as jnp
from jax import lax
from jax.experimental import pallas as pl
from jax.experimental.pallas import tpu as pltpu


# ---------------------------------------------------------------------------
# Hardware introspection (per-generation VMEM budgeting).
# ---------------------------------------------------------------------------
def _tpu_generation():
    try:
        kind = jax.devices()[0].device_kind.lower()
    except Exception:
        return None
    if "v5 lite" in kind or "v5e" in kind or "v5lite" in kind:
        return "v5e"
    if "v6" in kind:
        return "v6e"
    if "v7" in kind or "7x" in kind:
        return "v7x"
    return None


def _vmem_capacity_bytes():
    try:
        cap = int(pltpu.get_tpu_info().vmem_capacity_bytes)
        if cap > 0:
            return cap
    except Exception:
        pass
    gen = _tpu_generation()
    if gen in ("v5e", "v6e"):
        return 128 * 1024 * 1024
    # v7x (64 MiB per TensorCore) or unknown -> conservative.
    return 64 * 1024 * 1024


# ---------------------------------------------------------------------------
# Kernel.
# ---------------------------------------------------------------------------
def _dpatt_kernel(q_ref, k_ref, v_ref, h_ref, a_ref=None, *,
                  output_mode, scale, mxu_dtype, exp_dtype):
    """One grid step: block_b batch rows x block_q query rows vs full K/V."""
    # Fold 1/sqrt(d) into q (Tq*d VPU multiplies instead of Tq*Tk), then cast
    # MXU operands to bf16 when the inputs are f32 (f32 MXU is multi-pass and
    # unsupported on v7x); accumulation stays f32.
    q = (q_ref[...] * scale).astype(mxu_dtype)     # (BB, TQ, d)
    k = k_ref[...].astype(mxu_dtype)               # (BB, Tk, d)

    # scores = q @ k^T with the transpose folded into the contraction
    # (no materialized k.T / XLU transpose); f32 accumulation on the MXU.
    s = lax.dot_general(
        q, k,
        dimension_numbers=(((2,), (2,)), ((0,), (0,))),
        preferred_element_type=jnp.float32,
    )                                              # (BB, TQ, Tk), f32

    # Numerically-stable softmax over Tk.
    m = jnp.max(s, axis=-1, keepdims=True)
    if exp_dtype == jnp.bfloat16:
        # v6e/v7x bf16 EUP path (~2x exp throughput); denom kept in f32.
        e = jnp.exp((s - m).astype(jnp.bfloat16))
        denom = jnp.sum(e.astype(jnp.float32), axis=-1, keepdims=True)
        inv = 1.0 / denom                          # exact per-row reciprocal
        p = e * inv.astype(jnp.bfloat16)           # bf16, store/matmul-ready
    else:
        e = jnp.exp(s - m)
        denom = jnp.sum(e, axis=-1, keepdims=True)
        inv = 1.0 / denom                          # exact: rows of alphas sum to 1
        p = e * inv                                # f32

    if a_ref is not None:
        a_ref[...] = p.astype(a_ref.dtype)

    # TODO(synk): dropout p > 0 not implemented (wrapper asserts dropout == 0);
    # would use pltpu.prng_seed / pltpu.stateful_bernoulli on `p`.
    if output_mode == 0:
        v = v_ref[...].astype(mxu_dtype)
        h = lax.dot_general(
            p.astype(mxu_dtype), v,
            dimension_numbers=(((2,), (1,)), ((0,), (0,))),
            preferred_element_type=jnp.float32,
        )                                          # (BB, TQ, dv)
        h_ref[...] = h.astype(h_ref.dtype)
    else:
        # PyTorch mode 1: h = values; h[i, j, :] *= alphas[i, 0, j].
        # Only the qi == 0 tile holds alphas row 0; h block is revisited
        # across qi (q axis is "arbitrary"), so write it exactly once.
        @pl.when(pl.program_id(1) == 0)
        def _():
            w = p[:, 0, :].astype(jnp.float32)[:, :, None]   # (BB, Tk, 1)
            h_ref[...] = (v_ref[...].astype(jnp.float32) * w).astype(h_ref.dtype)


# ---------------------------------------------------------------------------
# Tiling heuristics.
# ---------------------------------------------------------------------------
def _choose_block_b(B, Tq, Tk, d, dv):
    # Pack several batch elements per grid step only when each element's tiles
    # are tiny; otherwise the ~0.35us per-step overhead is already amortized.
    if Tq > 128 or Tk > 128 or d > 256 or dv > 256:
        return 1
    for cand in (8, 4, 2):
        if B % cand == 0:
            return cand
    return 1


def _vmem_cost(block_b, block_q, Tk, Tv, d, dv, in_itemsize, a_itemsize,
               kv_buffers, output_mode, return_alphas):
    """Estimated VMEM: pipeline buffers + in-kernel f32 temporaries."""
    q_tile = block_q * d * in_itemsize
    h_tile = (block_q * dv if output_mode == 0 else Tv * dv) * in_itemsize
    a_tile = block_q * Tk * a_itemsize if return_alphas else 0
    kv_tile = Tk * (d + dv) * in_itemsize
    pipeline = block_b * (2 * (q_tile + h_tile + a_tile) + kv_buffers * kv_tile)
    # f32 score/exp/prob temporaries (s, e, p) live alongside the DMA buffers.
    temps = 3 * block_b * block_q * Tk * 4
    return pipeline + temps


def _choose_block_q(Tq, cost_fn, budget_bytes):
    if cost_fn(Tq) <= budget_bytes:
        return Tq
    for cand in (2048, 1024, 512, 384, 256, 128, 64, 32, 16, 8):
        if Tq % cand == 0 and cost_fn(cand) <= budget_bytes:
            return cand
    # Fall back: smallest multiple-of-8 divisor (or the full Tq if none).
    for cand in (8, 16, 32, 64, 128, 256):
        if Tq % cand == 0:
            return cand
    return Tq


def _kv_block_spec(block_shape, index_map, buffers):
    """K/V spec; single-buffered when VMEM is tight (index_map ignores qi, so
    the block only changes once per batch block)."""
    if buffers != 2 and hasattr(pl, "Buffered"):
        try:
            return pl.BlockSpec(block_shape, index_map,
                                pipeline_mode=pl.Buffered(buffers))
        except Exception:
            pass
    return pl.BlockSpec(block_shape, index_map)


# ---------------------------------------------------------------------------
# Public wrapper.
# ---------------------------------------------------------------------------
def dpatt(queries, keys, values, output_mode=0, dropout=0.0, *,
          alphas_dtype=None, mxu_dtype=None, exp_dtype=None,
          return_alphas=True, block_q=None, block_b=None):
    """Dot-product attention matching DPATT.forward (dropout must be 0)."""
    assert dropout == 0.0, "dropout > 0 is not implemented in the Pallas kernel"
    B, Tq, d = queries.shape
    Bk, Tk, dk = keys.shape
    Bv, Tv, dv = values.shape
    assert B == Bk == Bv and d == dk and Tk == Tv

    # TODO(synk): for d / dv / Tk < 128 the lane dim underfills vregs and the
    # alphas/h stores become masked; padding the lane dim to 128 in the wrapper
    # (and slicing back) would make the stores lane-dense.
    # TODO(synk): very long Tk (>~8K) needs a third "arbitrary" Tk grid axis
    # with an online-softmax (flash-style) carry; the current layout keeps the
    # full K/V blocks plus the (block_q, Tk) f32 score block resident in VMEM.

    # The O(Tq*Tk) alphas writeback dominates HBM traffic; emit it in the
    # input dtype (e.g. bf16 halves it) instead of hard-coded f32.
    if alphas_dtype is None:
        alphas_dtype = queries.dtype
    alphas_dtype = np.dtype(alphas_dtype)
    in_itemsize = queries.dtype.itemsize

    if mxu_dtype is None:
        # f32 matmul is multi-pass on the MXU (and absent on v7x); cast f32
        # operands to bf16, keep f32 accumulation. Pass jnp.float32 explicitly
        # for an exact-precision path.
        mxu_dtype = jnp.bfloat16 if queries.dtype == jnp.float32 else queries.dtype
    mxu_dtype = np.dtype(mxu_dtype)

    gen = _tpu_generation()
    if exp_dtype is None:
        if (alphas_dtype == np.dtype(jnp.bfloat16)
                and mxu_dtype == np.dtype(jnp.bfloat16)
                and gen in ("v6e", "v7x")):
            exp_dtype = jnp.bfloat16     # bf16 EUP (~2x exp throughput)
        else:
            exp_dtype = jnp.float32      # v5e has no bf16 EUP; keep f32
    exp_dtype = np.dtype(exp_dtype)

    # Per-generation VMEM budget (feedback: don't leave half of v5e/v6e VMEM
    # unused; don't overrun v7x's 64 MiB per TensorCore).
    vmem_cap = _vmem_capacity_bytes()
    if vmem_cap >= 96 * 1024 * 1024:          # v5e / v6e (128 MiB)
        chooser_budget = 56 * 1024 * 1024
        vmem_limit = 96 * 1024 * 1024
        kv_buffers = 2
    else:                                     # v7x (64 MiB / TC) or unknown
        chooser_budget = 22 * 1024 * 1024
        vmem_limit = min(44 * 1024 * 1024, int(vmem_cap * 0.70))
        kv_buffers = 1                        # single-buffer K/V: halves footprint

    if block_b is None:
        block_b = _choose_block_b(B, Tq, Tk, d, dv)
    cost_fn = functools.partial(
        _vmem_cost, block_b, Tk=Tk, Tv=Tv, d=d, dv=dv,
        in_itemsize=in_itemsize, a_itemsize=alphas_dtype.itemsize,
        kv_buffers=kv_buffers, output_mode=output_mode,
        return_alphas=return_alphas)
    if block_q is None:
        block_q = _choose_block_q(Tq, cost_fn, chooser_budget)
    assert B % block_b == 0 and Tq % block_q == 0

    nb = B // block_b
    nq = Tq // block_q
    # v7x has 2 TensorCores: guarantee >= 2 blocks along a parallel axis.
    if output_mode == 0 and nb == 1 and nq == 1 and block_q % 16 == 0:
        block_q //= 2
        nq = 2

    if output_mode == 0:
        h_shape = (B, Tq, dv)
        h_spec = pl.BlockSpec((block_b, block_q, dv), lambda b, qi: (b, qi, 0))
    else:
        h_shape = (B, Tv, dv)
        h_spec = pl.BlockSpec((block_b, Tv, dv), lambda b, qi: (b, 0, 0))

    kernel = functools.partial(
        _dpatt_kernel, output_mode=output_mode, scale=1.0 / math.sqrt(d),
        mxu_dtype=mxu_dtype, exp_dtype=exp_dtype)

    if return_alphas:
        out_shape = (jax.ShapeDtypeStruct(h_shape, queries.dtype),
                     jax.ShapeDtypeStruct((B, Tq, Tk), alphas_dtype))
        out_specs = (h_spec,
                     pl.BlockSpec((block_b, block_q, Tk), lambda b, qi: (b, qi, 0)))
    else:
        out_shape = jax.ShapeDtypeStruct(h_shape, queries.dtype)
        out_specs = h_spec

    bytes_accessed = ((queries.size + keys.size + values.size) * in_itemsize
                      + B * h_shape[1] * dv * in_itemsize)
    if return_alphas:
        bytes_accessed += B * Tq * Tk * alphas_dtype.itemsize
    cost = pl.CostEstimate(
        flops=2 * B * Tq * Tk * (d + (dv if output_mode == 0 else 0)),
        transcendentals=B * Tq * Tk,
        bytes_accessed=bytes_accessed,
    )

    def _call(kv_bufs):
        in_specs = [
            # q tiled along the query axis; K/V index_maps ignore qi so the
            # same K/V blocks stay VMEM-resident across the whole q sweep.
            pl.BlockSpec((block_b, block_q, d), lambda b, qi: (b, qi, 0)),
            _kv_block_spec((block_b, Tk, d), lambda b, qi: (b, 0, 0), kv_bufs),
            _kv_block_spec((block_b, Tv, dv), lambda b, qi: (b, 0, 0), kv_bufs),
        ]
        return pl.pallas_call(
            kernel,
            out_shape=out_shape,
            grid_spec=pltpu.PrefetchScalarGridSpec(
                num_scalar_prefetch=0,
                grid=(nb, nq),
                in_specs=in_specs,
                out_specs=out_specs,
            ),
            compiler_params=pltpu.CompilerParams(
                # Both axes are independent in mode 0 -> shardable across the
                # two TensorCores on v7x; mode 1 keeps h resident across qi.
                dimension_semantics=(
                    "parallel", "parallel" if output_mode == 0 else "arbitrary"),
                vmem_limit_bytes=vmem_limit,
            ),
            cost_estimate=cost,
        )(queries, keys, values)

    try:
        outs = _call(kv_buffers)
    except Exception:
        if kv_buffers == 1:
            outs = _call(2)      # fall back to default double-buffered K/V
        else:
            raise

    return outs


# ---------------------------------------------------------------------------
# Pure-JAX reference and self-test.
# ---------------------------------------------------------------------------
def _dpatt_ref(queries, keys, values, output_mode=0):
    d = queries.shape[-1]
    s = jnp.einsum("bqd,bkd->bqk", queries.astype(jnp.float32),
                   keys.astype(jnp.float32)) / jnp.sqrt(jnp.float32(d))
    alphas = jax.nn.softmax(s, axis=-1)
    if output_mode == 0:
        h = jnp.einsum("bqk,bkv->bqv", alphas, values.astype(jnp.float32))
    else:
        h = values.astype(jnp.float32) * alphas[:, 0, :][:, :, None]
    return h, alphas


if __name__ == "__main__":
    key = jax.random.PRNGKey(0)
    kq, kk, kvk = jax.random.split(key, 3)
    B, Tq, Tk, d, dv = 2, 8, 8, 32, 32
    q = jax.random.normal(kq, (B, Tq, d), dtype=jnp.float32)
    k = jax.random.normal(kk, (B, Tk, d), dtype=jnp.float32)
    v = jax.random.normal(kvk, (B, Tk, dv), dtype=jnp.float32)

    h0_ref, a_ref = _dpatt_ref(q, k, v, output_mode=0)
    h1_ref, _ = _dpatt_ref(q, k, v, output_mode=1)

    # Default (fast) path: bf16 MXU operands, f32 accumulation.
    h0, a0 = dpatt(q, k, v, output_mode=0)
    jax.block_until_ready((h0, a0))
    assert jnp.allclose(a0, a_ref, atol=3e-2, rtol=3e-2)
    assert jnp.allclose(h0, h0_ref, atol=3e-2, rtol=3e-2)
    # Exact per-row reciprocal -> softmax rows sum to ~1.
    assert jnp.allclose(jnp.sum(a0.astype(jnp.float32), axis=-1), 1.0, atol=1e-3)

    # High-precision path: f32 MXU.
    h0p, a0p = dpatt(q, k, v, output_mode=0, mxu_dtype=jnp.float32)
    jax.block_until_ready((h0p, a0p))
    assert jnp.allclose(a0p, a_ref, atol=2e-3, rtol=2e-3)
    assert jnp.allclose(h0p, h0_ref, atol=2e-3, rtol=2e-3)

    # output_mode == 1 (values reweighted row-wise by alphas[:, 0, :]).
    h1, a1 = dpatt(q, k, v, output_mode=1, mxu_dtype=jnp.float32)
    jax.block_until_ready((h1, a1))
    assert jnp.allclose(a1, a_ref, atol=2e-3, rtol=2e-3)
    assert jnp.allclose(h1, h1_ref, atol=2e-3, rtol=2e-3)

    # h-only path (skip the O(Tq*Tk) alphas writeback entirely).
    h_only = dpatt(q, k, v, output_mode=0, return_alphas=False)
    jax.block_until_ready(h_only)
    assert jnp.allclose(h_only, h0_ref, atol=3e-2, rtol=3e-2)

    print("KERNEL_OK")
</pallas_src>

<mosaic_0001>
module attributes {stable_mosaic.version = 11 : i64} {
  func.func @_dpatt_kernel(%arg0: i32, %arg1: i32, %arg2: memref<2x8x32xf32, #tpu.memory_space<vmem>>, %arg3: memref<2x8x32xf32, #tpu.memory_space<vmem>>, %arg4: memref<2x8x32xf32, #tpu.memory_space<vmem>>, %arg5: memref<2x8x32xf32, #tpu.memory_space<vmem>>, %arg6: memref<2x8x8xf32, #tpu.memory_space<vmem>>) attributes {dimension_semantics = [#tpu.dimension_semantics<parallel>, #tpu.dimension_semantics<parallel>], iteration_bounds = array<i64: 1, 1>, scalar_prefetch = 0 : i64, scratch_operands = 0 : i64, tpu.core_type = #tpu.core_type<tc>, window_params = [{transform_indices = @transform_0, window_bounds = array<i64: 2, 8, 32>}, {pipeline_mode = #tpu.pipeline_mode<synchronous>, transform_indices = @transform_1, window_bounds = array<i64: 2, 8, 32>}, {pipeline_mode = #tpu.pipeline_mode<synchronous>, transform_indices = @transform_2, window_bounds = array<i64: 2, 8, 32>}, {transform_indices = @transform_3, window_bounds = array<i64: 2, 8, 32>}, {transform_indices = @transform_4, window_bounds = array<i64: 2, 8, 8>}]} {
    %c0 = arith.constant 0 : index
    %c0_0 = arith.constant 0 : index
    %c0_1 = arith.constant 0 : index
    %0 = vector.load %arg2[%c0, %c0_0, %c0_1] : memref<2x8x32xf32, #tpu.memory_space<vmem>>, vector<2x8x32xf32>
    %cst = arith.constant 0.176776692 : f32
    %1 = vector.broadcast %cst : f32 to vector<2x8x32xf32>
    %2 = arith.mulf %0, %1 : vector<2x8x32xf32>
    %3 = arith.truncf %2 : vector<2x8x32xf32> to vector<2x8x32xbf16>
    %c0_2 = arith.constant 0 : index
    %c0_3 = arith.constant 0 : index
    %c0_4 = arith.constant 0 : index
    %4 = vector.load %arg3[%c0_2, %c0_3, %c0_4] : memref<2x8x32xf32, #tpu.memory_space<vmem>>, vector<2x8x32xf32>
    %5 = arith.truncf %4 : vector<2x8x32xf32> to vector<2x8x32xbf16>
    %cst_5 = arith.constant dense<0.000000e+00> : vector<2x8x8xf32>
    %6 = tpu.matmul %3, %5, %cst_5 {dimension_numbers = #tpu.dot_dimension_numbers<[2], [2], [1], [1], [0, 0, 0, 1, 1, 1], [0], [0]>} : vector<2x8x32xbf16>, vector<2x8x32xbf16>, vector<2x8x8xf32> -> vector<2x8x8xf32>
    %cst_6 = arith.constant dense<0xFF800000> : vector<2x8xf32>
    %7 = vector.multi_reduction <maximumf>, %6, %cst_6 [2] : vector<2x8x8xf32> to vector<2x8xf32>
    %8 = vector.shape_cast %7 : vector<2x8xf32> to vector<2x8x1xf32>
    %9 = vector.broadcast %8 : vector<2x8x1xf32> to vector<2x8x8xf32>
    %10 = arith.subf %6, %9 : vector<2x8x8xf32>
    %11 = math.exp %10 : vector<2x8x8xf32>
    %cst_7 = arith.constant dense<0.000000e+00> : vector<2x8xf32>
    %12 = vector.multi_reduction <add>, %11, %cst_7 [2] : vector<2x8x8xf32> to vector<2x8xf32>
    %13 = vector.shape_cast %12 : vector<2x8xf32> to vector<2x8x1xf32>
    %cst_8 = arith.constant 1.000000e+00 : f32
    %14 = vector.broadcast %cst_8 : f32 to vector<2x8x1xf32>
    %15 = arith.divf %14, %13 : vector<2x8x1xf32>
    %16 = vector.broadcast %15 : vector<2x8x1xf32> to vector<2x8x8xf32>
    %17 = arith.mulf %11, %16 : vector<2x8x8xf32>
    %c0_9 = arith.constant 0 : index
    %c0_10 = arith.constant 0 : index
    %c0_11 = arith.constant 0 : index
    %18 = vector.load %arg6[%c0_9, %c0_10, %c0_11] : memref<2x8x8xf32, #tpu.memory_space<vmem>>, vector<2x8x8xf32>
    tpu.vector_store %arg6[%c0_9, %c0_10, %c0_11], %17 {strides = array<i32>} : memref<2x8x8xf32, #tpu.memory_space<vmem>>, vector<2x8x8xf32>,
    %c0_12 = arith.constant 0 : index
    %c0_13 = arith.constant 0 : index
    %c0_14 = arith.constant 0 : index
    %19 = vector.load %arg4[%c0_12, %c0_13, %c0_14] : memref<2x8x32xf32, #tpu.memory_space<vmem>>, vector<2x8x32xf32>
    %20 = arith.truncf %19 : vector<2x8x32xf32> to vector<2x8x32xbf16>
    %21 = arith.truncf %17 : vector<2x8x8xf32> to vector<2x8x8xbf16>
    %cst_15 = arith.constant dense<0.000000e+00> : vector<2x8x32xf32>
    %22 = tpu.matmul %21, %20, %cst_15 {dimension_numbers = #tpu.dot_dimension_numbers<[2], [1], [1], [2], [0, 0, 0, 1, 1, 2], [0], [0]>} : vector<2x8x8xbf16>, vector<2x8x32xbf16>, vector<2x8x32xf32> -> vector<2x8x32xf32>
    %c0_16 = arith.constant 0 : index
    %c0_17 = arith.constant 0 : index
    %c0_18 = arith.constant 0 : index
    %23 = vector.load %arg5[%c0_16, %c0_17, %c0_18] : memref<2x8x32xf32, #tpu.memory_space<vmem>>, vector<2x8x32xf32>
    tpu.vector_store %arg5[%c0_16, %c0_17, %c0_18], %22 {strides = array<i32>} : memref<2x8x32xf32, #tpu.memory_space<vmem>>, vector<2x8x32xf32>,
    return
  }
  func.func @transform_0(%arg0: i32, %arg1: i32) -> (i32, i32, i32) {
    %c0_i32 = arith.constant 0 : i32
    %c0_i32_0 = arith.constant 0 : i32
    return %arg0, %arg1, %c0_i32 : i32, i32, i32
  }
  func.func @transform_1(%arg0: i32, %arg1: i32) -> (i32, i32, i32) {
    %c0_i32 = arith.constant 0 : i32
    %c0_i32_0 = arith.constant 0 : i32
    %c0_i32_1 = arith.constant 0 : i32
    return %arg0, %c0_i32, %c0_i32_0 : i32, i32, i32
  }
  func.func @transform_2(%arg0: i32, %arg1: i32) -> (i32, i32, i32) {
    %c0_i32 = arith.constant 0 : i32
    %c0_i32_0 = arith.constant 0 : i32
    %c0_i32_1 = arith.constant 0 : i32
    return %arg0, %c0_i32, %c0_i32_0 : i32, i32, i32
  }
  func.func @transform_3(%arg0: i32, %arg1: i32) -> (i32, i32, i32) {
    %c0_i32 = arith.constant 0 : i32
    %c0_i32_0 = arith.constant 0 : i32
    return %arg0, %arg1, %c0_i32 : i32, i32, i32
  }
  func.func @transform_4(%arg0: i32, %arg1: i32) -> (i32, i32, i32) {
    %c0_i32 = arith.constant 0 : i32
    %c0_i32_0 = arith.constant 0 : i32
    return %arg0, %arg1, %c0_i32 : i32, i32, i32
  }
}

module attributes {stable_mosaic.version = 11 : i64} {
  func.func @_dpatt_kernel(%arg0: i32, %arg1: i32, %arg2: memref<2x8x32xf32, #tpu.memory_space<vmem>>, %arg3: memref<2x8x32xf32, #tpu.memory_space<vmem>>, %arg4: memref<2x8x32xf32, #tpu.memory_space<vmem>>, %arg5: memref<2x8x32xf32, #tpu.memory_space<vmem>>, %arg6: memref<2x8x8xf32, #tpu.memory_space<vmem>>) attributes {dimension_semantics = [#tpu.dimension_semantics<parallel>, #tpu.dimension_semantics<parallel>], iteration_bounds = array<i64: 1, 1>, scalar_prefetch = 0 : i64, scratch_operands = 0 : i64, tpu.core_type = #tpu.core_type<tc>, window_params = [{transform_indices = @transform_0, window_bounds = array<i64: 2, 8, 32>}, {transform_indices = @transform_1, window_bounds = array<i64: 2, 8, 32>}, {transform_indices = @transform_2, window_bounds = array<i64: 2, 8, 32>}, {transform_indices = @transform_3, window_bounds = array<i64: 2, 8, 32>}, {transform_indices = @transform_4, window_bounds = array<i64: 2, 8, 8>}]} {
    %c0 = arith.constant 0 : index
    %c0_0 = arith.constant 0 : index
    %c0_1 = arith.constant 0 : index
    %0 = vector.load %arg2[%c0, %c0_0, %c0_1] : memref<2x8x32xf32, #tpu.memory_space<vmem>>, vector<2x8x32xf32>
    %cst = arith.constant 0.176776692 : f32
    %1 = vector.broadcast %cst : f32 to vector<2x8x32xf32>
    %2 = arith.mulf %0, %1 : vector<2x8x32xf32>
    %3 = arith.truncf %2 : vector<2x8x32xf32> to vector<2x8x32xbf16>
    %c0_2 = arith.constant 0 : index
    %c0_3 = arith.constant 0 : index
    %c0_4 = arith.constant 0 : index
    %4 = vector.load %arg3[%c0_2, %c0_3, %c0_4] : memref<2x8x32xf32, #tpu.memory_space<vmem>>, vector<2x8x32xf32>
    %5 = arith.truncf %4 : vector<2x8x32xf32> to vector<2x8x32xbf16>
    %cst_5 = arith.constant dense<0.000000e+00> : vector<2x8x8xf32>
    %6 = tpu.matmul %3, %5, %cst_5 {dimension_numbers = #tpu.dot_dimension_numbers<[2], [2], [1], [1], [0, 0, 0, 1, 1, 1], [0], [0]>} : vector<2x8x32xbf16>, vector<2x8x32xbf16>, vector<2x8x8xf32> -> vector<2x8x8xf32>
    %cst_6 = arith.constant dense<0xFF800000> : vector<2x8xf32>
    %7 = vector.multi_reduction <maximumf>, %6, %cst_6 [2] : vector<2x8x8xf32> to vector<2x8xf32>
    %8 = vector.shape_cast %7 : vector<2x8xf32> to vector<2x8x1xf32>
    %9 = vector.broadcast %8 : vector<2x8x1xf32> to vector<2x8x8xf32>
    %10 = arith.subf %6, %9 : vector<2x8x8xf32>
    %11 = math.exp %10 : vector<2x8x8xf32>
    %cst_7 = arith.constant dense<0.000000e+00> : vector<2x8xf32>
    %12 = vector.multi_reduction <add>, %11, %cst_7 [2] : vector<2x8x8xf32> to vector<2x8xf32>
    %13 = vector.shape_cast %12 : vector<2x8xf32> to vector<2x8x1xf32>
    %cst_8 = arith.constant 1.000000e+00 : f32
    %14 = vector.broadcast %cst_8 : f32 to vector<2x8x1xf32>
    %15 = arith.divf %14, %13 : vector<2x8x1xf32>
    %16 = vector.broadcast %15 : vector<2x8x1xf32> to vector<2x8x8xf32>
    %17 = arith.mulf %11, %16 : vector<2x8x8xf32>
    %c0_9 = arith.constant 0 : index
    %c0_10 = arith.constant 0 : index
    %c0_11 = arith.constant 0 : index
    %18 = vector.load %arg6[%c0_9, %c0_10, %c0_11] : memref<2x8x8xf32, #tpu.memory_space<vmem>>, vector<2x8x8xf32>
    tpu.vector_store %arg6[%c0_9, %c0_10, %c0_11], %17 {strides = array<i32>} : memref<2x8x8xf32, #tpu.memory_space<vmem>>, vector<2x8x8xf32>,
    %c0_12 = arith.constant 0 : index
    %c0_13 = arith.constant 0 : index
    %c0_14 = arith.constant 0 : index
    %19 = vector.load %arg4[%c0_12, %c0_13, %c0_14] : memref<2x8x32xf32, #tpu.memory_space<vmem>>, vector<2x8x32xf32>
    %20 = arith.truncf %19 : vector<2x8x32xf32> to vector<2x8x32xbf16>
    %21 = arith.truncf %17 : vector<2x8x8xf32> to vector<2x8x8xbf16>
    %cst_15 = arith.constant dense<0.000000e+00> : vector<2x8x32xf32>
    %22 = tpu.matmul %21, %20, %cst_15 {dimension_numbers = #tpu.dot_dimension_numbers<[2], [1], [1], [2], [0, 0, 0, 1, 1, 2], [0], [0]>} : vector<2x8x8xbf16>, vector<2x8x32xbf16>, vector<2x8x32xf32> -> vector<2x8x32xf32>
    %c0_16 = arith.constant 0 : index
    %c0_17 = arith.constant 0 : index
    %c0_18 = arith.constant 0 : index
    %23 = vector.load %arg5[%c0_16, %c0_17, %c0_18] : memref<2x8x32xf32, #tpu.memory_space<vmem>>, vector<2x8x32xf32>
    tpu.vector_store %arg5[%c0_16, %c0_17, %c0_18], %22 {strides = array<i32>} : memref<2x8x32xf32, #tpu.memory_space<vmem>>, vector<2x8x32xf32>,
    return
  }
  func.func @transform_0(%arg0: i32, %arg1: i32) -> (i32, i32, i32) {
    %c0_i32 = arith.constant 0 : i32
    %c0_i32_0 = arith.constant 0 : i32
    return %arg0, %arg1, %c0_i32 : i32, i32, i32
  }
  func.func @transform_1(%arg0: i32, %arg1: i32) -> (i32, i32, i32) {
    %c0_i32 = arith.constant 0 : i32
    %c0_i32_0 = arith.constant 0 : i32
    %c0_i32_1 = arith.constant 0 : i32
    return %arg0, %c0_i32, %c0_i32_0 : i32, i32, i32
  }
  func.func @transform_2(%arg0: i32, %arg1: i32) -> (i32, i32, i32) {
    %c0_i32 = arith.constant 0 : i32
    %c0_i32_0 = arith.constant 0 : i32
    %c0_i32_1 = arith.constant 0 : i32
    return %arg0, %c0_i32, %c0_i32_0 : i32, i32, i32
  }
  func.func @transform_3(%arg0: i32, %arg1: i32) -> (i32, i32, i32) {
    %c0_i32 = arith.constant 0 : i32
    %c0_i32_0 = arith.constant 0 : i32
    return %arg0, %arg1, %c0_i32 : i32, i32, i32
  }
  func.func @transform_4(%arg0: i32, %arg1: i32) -> (i32, i32, i32) {
    %c0_i32 = arith.constant 0 : i32
    %c0_i32_0 = arith.constant 0 : i32
    return %arg0, %arg1, %c0_i32 : i32, i32, i32
  }
}

</mosaic_0001>

<llo_original>
// kernel: tpu_custom_call.1
$region0: #{tpu_custom_call.1}
  #allocation0 [shape = 'u32[]', space=smem, size = 0x4, offset = 0x4, fixed_abs, tag = 'smem constant byte address 0x4 - core index']
  #allocation1 [shape = 'u32[144,128]{1,0:T(1,128)}', space=vmem, size = 0x12000, scoped, tag = 'internal scratch']
  %s0 = inlined_call_operand.hbm [shape: f32[2,8,32], index: 0, kind: input, shape index: {}]
  %s1 = inlined_call_operand.hbm [shape: f32[2,8,32], index: 1, kind: input, shape index: {}]
  %s2 = inlined_call_operand.hbm [shape: f32[2,8,32], index: 2, kind: input, shape index: {}]
  %s3 = inlined_call_operand.hbm [shape: f32[2,8,32], index: 3, kind: output, shape index: {0}]
  %s4 = inlined_call_operand.hbm [shape: f32[2,8,8], index: 4, kind: output, shape index: {1}]
  %5 = xla_tuple %s3, %s4
  %s6 = sld [smem:[#allocation0]]
  $region42: #{tpu_custom_call.1} parent=0
    _
  %s8 = ssub.s32 1, %s6
  %s9 = scalar_select 0, %s8, %s6
  $region1: #{tpu_custom_call.1} parent=0
    #allocation2 [shape = 'u8[8192]{0}', space=vmem, size = 0x2000, scoped, tag = 'input window, operand 0, single buffered']
    #allocation3 [shape = 's32[1]{0}', space=sflag, size = 0x4, scoped, tag = 'scoped memory for tpu_custom_call.1']
    #allocation4 [shape = 's32[1]{0}', space=sflag, size = 0x4, scoped, tag = 'scoped memory for tpu_custom_call.1']
    #allocation5 [shape = 'u8[8192]{0}', space=vmem, size = 0x2000, scoped, tag = 'input window, operand 1, single buffered']
    #allocation6 [shape = 's32[1]{0}', space=sflag, size = 0x4, scoped, tag = 'scoped memory for tpu_custom_call.1']
    #allocation7 [shape = 'u8[8192]{0}', space=vmem, size = 0x2000, scoped, tag = 'input window, operand 2, single buffered']
    #allocation8 [shape = 'u8[8192]{0}', space=vmem, size = 0x2000, scoped, tag = 'output window, operand 0, single buffered']
    #allocation9 [shape = 'u8[8192]{0}', space=vmem, size = 0x2000, scoped, tag = 'output window, operand 1, single buffered']
    #allocation10 [shape = 's32[1]{0}', space=sflag, size = 0x4, scoped, tag = 'scoped memory for tpu_custom_call.1']
    %10 = vsyncpa [#allocation3], 0
    %11 = vsyncpa [#allocation6], 0
    %12 = vsyncpa [#allocation4], 0
    %13 = vsyncpa [#allocation10], 0
    // Predicated region
    $region2: #{tpu_custom_call.1} parent=1 // pred_check
      _
    $region3: #{tpu_custom_call.1} parent=1 // pred_check_branch
      %15 = sbr.rel (0) target = $region5
    $region4: #{tpu_custom_call.1} parent=1 // pred_region
      %s17 = ssub.s32 256, 256
      %18 = vsyncadd [#allocation3], %s17
      %s19 = sshll.u32 [#allocation2], 4
      %s20 = int_to_ptr.vmem [resolvable:$true] %s19
      %25 = dma.hbm_to_vmem [thread:$0]  %s0, 256, %s20, [#allocation3], 128, 128, 8
    $region5: #{tpu_custom_call.1} parent=1 // pred_fallthru
      _
    // Predicated region
    $region6: #{tpu_custom_call.1} parent=1 // pred_check
      _
    $region7: #{tpu_custom_call.1} parent=1 // pred_check_branch
      %27 = sbr.rel (0) target = $region9
    $region8: #{tpu_custom_call.1} parent=1 // pred_region
      %s29 = ssub.s32 256, 256
      %30 = vsyncadd [#allocation6], %s29
      %s31 = sshll.u32 [#allocation5], 4
      %s32 = int_to_ptr.vmem [resolvable:$true] %s31
      %37 = dma.hbm_to_vmem [thread:$0]  %s1, 256, %s32, [#allocation6], 128, 128, 8
    $region9: #{tpu_custom_call.1} parent=1 // pred_fallthru
      _
    // Predicated region
    $region10: #{tpu_custom_call.1} parent=1 // pred_check
      _
    $region11: #{tpu_custom_call.1} parent=1 // pred_check_branch
      %39 = sbr.rel (0) target = $region13
    $region12: #{tpu_custom_call.1} parent=1 // pred_region
      %s41 = ssub.s32 256, 256
      %42 = vsyncadd [#allocation6], %s41
      %s43 = sshll.u32 [#allocation7], 4
      %s44 = int_to_ptr.vmem [resolvable:$true] %s43
      %49 = dma.hbm_to_vmem [thread:$0]  %s2, 256, %s44, [#allocation6], 128, 128, 8
    $region13: #{tpu_custom_call.1} parent=1 // pred_fallthru
      _
    // Predicated region
    $region14: #{tpu_custom_call.1} parent=1 // pred_check
      _
    $region15: #{tpu_custom_call.1} parent=1 // pred_check_branch
      %51 = sbr.rel (0) target = $region17
    $region16: #{tpu_custom_call.1} parent=1 // pred_region
      %52 = dma.done [#allocation3], 256
    $region17: #{tpu_custom_call.1} parent=1 // pred_fallthru
      _
    // Predicated region
    $region18: #{tpu_custom_call.1} parent=1 // pred_check
      _
    $region19: #{tpu_custom_call.1} parent=1 // pred_check_branch
      %54 = sbr.rel (0) target = $region21
    $region20: #{tpu_custom_call.1} parent=1 // pred_region
      %55 = dma.done [#allocation6], 256
    $region21: #{tpu_custom_call.1} parent=1 // pred_fallthru
      _
    // Predicated region
    $region22: #{tpu_custom_call.1} parent=1 // pred_check
      _
    $region23: #{tpu_custom_call.1} parent=1 // pred_check_branch
      %57 = sbr.rel (0) target = $region25
    $region24: #{tpu_custom_call.1} parent=1 // pred_region
      %58 = dma.done [#allocation6], 256
    $region25: #{tpu_custom_call.1} parent=1 // pred_fallthru
      _
    %v60 = vld [vmem:[#allocation2] sm:$0xff]
    %v61 = vld [vmem:[#allocation2 + $0x8] sm:$0xff]
    %v62 = vmul.f32 %v60, 0.17677669
    %v63 = vmul.f32 %v61, 0.17677669
    %v64 = vpack.c.bf16 %v62, %v62
    %v65 = vpack.c.bf16 %v63, %v63
    %v66 = vld [vmem:[#allocation5] sm:$0xff]
    %v67 = vld [vmem:[#allocation5 + $0x8] sm:$0xff]
    %v68 = vpack.c.bf16 %v66, %v66
    %v69 = vpack.c.bf16 %v67, %v67
    %vm70 = vcmask 261120
    %v72 = vsel %vm70, %v64, 0
    %v75 = vsel %vm70, %v68, 0
    %77 = vmatprep.subr.bf16.mxu0 0
    %78 = vmatpush1.bf16.xpose.msra.mxu0 %v75
    %79 = vmatprep.subr.bf16.mxu0 0
    %80 = vmatpush1.bf16.xpose.msra.mxu0 0
    %81 = vmatprep.subr.bf16.mxu0 0
    %82 = vmatpush1.bf16.xpose.msra.mxu0 0
    %83 = vmatprep.subr.bf16.mxu0 0
    %84 = vmatpush1.bf16.xpose.msra.mxu0 0
    %85 = vmatprep.subr.bf16.mxu0 0
    %86 = vmatpush1.bf16.xpose.msra.mxu0 0
    %87 = vmatprep.subr.bf16.mxu0 0
    %88 = vmatpush1.bf16.xpose.msra.mxu0 0
    %89 = vmatprep.subr.bf16.mxu0 0
    %90 = vmatpush1.bf16.xpose.msra.mxu0 0
    %91 = vmatprep.subr.bf16.mxu0 0
    %92 = vmatpush1.bf16.xpose.msra.mxu0 0
    %93 = vmatprep.subr.bf16.mxu0 0
    %94 = vmatpush1.bf16.xpose.msra.mxu0 0
    %95 = vmatprep.subr.bf16.mxu0 0
    %96 = vmatpush1.bf16.xpose.msra.mxu0 0
    %97 = vmatprep.subr.bf16.mxu0 0
    %98 = vmatpush1.bf16.xpose.msra.mxu0 0
    %99 = vmatprep.subr.bf16.mxu0 0
    %100 = vmatpush1.bf16.xpose.msra.mxu0 0
    %101 = vmatprep.subr.bf16.mxu0 0
    %102 = vmatpush1.bf16.xpose.msra.mxu0 0
    %103 = vmatprep.subr.bf16.mxu0 0
    %104 = vmatpush1.bf16.xpose.msra.mxu0 0
    %105 = vmatprep.subr.bf16.mxu0 0
    %106 = vmatpush1.bf16.xpose.msra.mxu0 0
    %107 = vmatprep.subr.bf16.mxu0 0
    %108 = vmatpush1.bf16.xpose.msra.mxu0 0
    %109 = vmatprep.mubr.bf16.mxu0 0
    %110 = vmatmul.mubr.bf16.gmra.mrb[0].mxu0 %v72
    %v111 = vpop.f32.mrb[0].mxu0
    %v112 = vadd.f32 0.0, %v111
    %v113 = vpop.f32.mrb[0].mxu0
    %v114 = vpop.f32.mrb[0].mxu0
    %v115 = vpop.f32.mrb[0].mxu0
    %116 = vdwg.mxu0
    %v118 = vsel %vm70, %v65, 0
    %v121 = vsel %vm70, %v69, 0
    %123 = vmatprep.subr.bf16.mxu0 0
    %124 = vmatpush1.bf16.xpose.msra.mxu0 %v121
    %125 = vmatprep.subr.bf16.mxu0 0
    %126 = vmatpush1.bf16.xpose.msra.mxu0 0
    %127 = vmatprep.subr.bf16.mxu0 0
    %128 = vmatpush1.bf16.xpose.msra.mxu0 0
    %129 = vmatprep.subr.bf16.mxu0 0
    %130 = vmatpush1.bf16.xpose.msra.mxu0 0
    %131 = vmatprep.subr.bf16.mxu0 0
    %132 = vmatpush1.bf16.xpose.msra.mxu0 0
    %133 = vmatprep.subr.bf16.mxu0 0
    %134 = vmatpush1.bf16.xpose.msra.mxu0 0
    %135 = vmatprep.subr.bf16.mxu0 0
    %136 = vmatpush1.bf16.xpose.msra.mxu0 0
    %137 = vmatprep.subr.bf16.mxu0 0
    %138 = vmatpush1.bf16.xpose.msra.mxu0 0
    %139 = vmatprep.subr.bf16.mxu0 0
    %140 = vmatpush1.bf16.xpose.msra.mxu0 0
    %141 = vmatprep.subr.bf16.mxu0 0
    %142 = vmatpush1.bf16.xpose.msra.mxu0 0
    %143 = vmatprep.subr.bf16.mxu0 0
    %144 = vmatpush1.bf16.xpose.msra.mxu0 0
    %145 = vmatprep.subr.bf16.mxu0 0
    %146 = vmatpush1.bf16.xpose.msra.mxu0 0
    %147 = vmatprep.subr.bf16.mxu0 0
    %148 = vmatpush1.bf16.xpose.msra.mxu0 0
    %149 = vmatprep.subr.bf16.mxu0 0
    %150 = vmatpush1.bf16.xpose.msra.mxu0 0
    %151 = vmatprep.subr.bf16.mxu0 0
    %152 = vmatpush1.bf16.xpose.msra.mxu0 0
    %153 = vmatprep.subr.bf16.mxu0 0
    %154 = vmatpush1.bf16.xpose.msra.mxu0 0
    %155 = vmatprep.mubr.bf16.mxu0 0
    %156 = vmatmul.mubr.bf16.gmra.mrb[0].mxu0 %v118
    %v157 = vpop.f32.mrb[0].mxu0
    %v158 = vadd.f32 0.0, %v157
    %v159 = vpop.f32.mrb[0].mxu0
    %v160 = vpop.f32.mrb[0].mxu0
    %v161 = vpop.f32.mrb[0].mxu0
    %162 = vdwg.mxu0
    %vm163 = vcmask 64512
    %v164 = vsel %vm163, %v112, -inf
    %165 = vmax.xlane.f32.xlu0 %v164
    %v166 = vpop.xlane.xlu0 %165
    %v167 = vsel %vm163, %v158, -inf
    %168 = vmax.xlane.f32.xlu0 %v167
    %v169 = vpop.xlane.xlu0 %168
    %v170 = vsub.f32 %v112, %v166
    %v171 = vsub.f32 %v158, %v169
    %v172 = vmul.f32 %v170, 1.442695
    %v173 = vpow.pop %v172
    %v174 = vmul.f32 %v171, 1.442695
    %v175 = vpow.pop %v174
    %v176 = vsel %vm163, %v173, 0.0
    %177 = vadd.xlane.f32.xlu0 %v176
    %v178 = vpop.xlane.xlu0 %177
    %v179 = vsel %vm163, %v175, 0.0
    %180 = vadd.xlane.f32.xlu0 %v179
    %v181 = vpop.xlane.xlu0 %180
    %v182 = vrcp.pop %v178
    %v183 = vmul.f32 1.0, %v182
    %v184 = vrcp.pop %v181
    %v185 = vmul.f32 1.0, %v184
    %v186 = vmul.f32 %v173, %v183
    %v187 = vmul.f32 %v175, %v185
    %188 = vst.msk [vmem:[#allocation9] sm:$0xff] %vm163, %v186
    %189 = vst.msk [vmem:[#allocation9 + $0x8] sm:$0xff] %vm163, %v187
    %v190 = vld [vmem:[#allocation7] sm:$0xff]
    %v191 = vld [vmem:[#allocation7 + $0x8] sm:$0xff]
    %v192 = vpack.c.bf16 %v190, %v190
    %v193 = vpack.c.bf16 %v191, %v191
    %v194 = vpack.c.bf16 %v186, %v186
    %v195 = vpack.c.bf16 %v187, %v187
    %v197 = vsel %vm163, %v194, 0
    %vm199 = vcmask 1043456
    %v201 = vsel %vm199, %v192, 0
    %203 = vmatprep.subr.bf16.mxu0 0
    %204 = vmatpush1.bf16.msra.mxu0 %v201
    %205 = vmatprep.subr.bf16.mxu0 0
    %206 = vmatpush1.bf16.msra.mxu0 0
    %207 = vmatprep.subr.bf16.mxu0 0
    %208 = vmatpush1.bf16.msra.mxu0 0
    %209 = vmatprep.subr.bf16.mxu0 0
    %210 = vmatpush1.bf16.msra.mxu0 0
    %211 = vmatprep.subr.bf16.mxu0 0
    %212 = vmatpush1.bf16.msra.mxu0 0
    %213 = vmatprep.subr.bf16.mxu0 0
    %214 = vmatpush1.bf16.msra.mxu0 0
    %215 = vmatprep.subr.bf16.mxu0 0
    %216 = vmatpush1.bf16.msra.mxu0 0
    %217 = vmatprep.subr.bf16.mxu0 0
    %218 = vmatpush1.bf16.msra.mxu0 0
    %219 = vmatprep.subr.bf16.mxu0 0
    %220 = vmatpush1.bf16.msra.mxu0 0
    %221 = vmatprep.subr.bf16.mxu0 0
    %222 = vmatpush1.bf16.msra.mxu0 0
    %223 = vmatprep.subr.bf16.mxu0 0
    %224 = vmatpush1.bf16.msra.mxu0 0
    %225 = vmatprep.subr.bf16.mxu0 0
    %226 = vmatpush1.bf16.msra.mxu0 0
    %227 = vmatprep.subr.bf16.mxu0 0
    %228 = vmatpush1.bf16.msra.mxu0 0
    %229 = vmatprep.subr.bf16.mxu0 0
    %230 = vmatpush1.bf16.msra.mxu0 0
    %231 = vmatprep.subr.bf16.mxu0 0
    %232 = vmatpush1.bf16.msra.mxu0 0
    %233 = vmatprep.subr.bf16.mxu0 0
    %234 = vmatpush1.bf16.msra.mxu0 0
    %235 = vmatprep.mubr.bf16.mxu0 0
    %236 = vmatmul.mubr.bf16.gmra.mrb[0].mxu0 %v197
    %v237 = vpop.f32.mrb[0].mxu0
    %v238 = vadd.f32 0.0, %v237
    %v239 = vpop.f32.mrb[0].mxu0
    %v240 = vpop.f32.mrb[0].mxu0
    %v241 = vpop.f32.mrb[0].mxu0
    %242 = vdwg.mxu0
    %v244 = vsel %vm163, %v195, 0
    %v247 = vsel %vm199, %v193, 0
    %249 = vmatprep.subr.bf16.mxu0 0
    %250 = vmatpush1.bf16.msra.mxu0 %v247
    %251 = vmatprep.subr.bf16.mxu0 0
    %252 = vmatpush1.bf16.msra.mxu0 0
    %253 = vmatprep.subr.bf16.mxu0 0
    %254 = vmatpush1.bf16.msra.mxu0 0
    %255 = vmatprep.subr.bf16.mxu0 0
    %256 = vmatpush1.bf16.msra.mxu0 0
    %257 = vmatprep.subr.bf16.mxu0 0
    %258 = vmatpush1.bf16.msra.mxu0 0
    %259 = vmatprep.subr.bf16.mxu0 0
    %260 = vmatpush1.bf16.msra.mxu0 0
    %261 = vmatprep.subr.bf16.mxu0 0
    %262 = vmatpush1.bf16.msra.mxu0 0
    %263 = vmatprep.subr.bf16.mxu0 0
    %264 = vmatpush1.bf16.msra.mxu0 0
    %265 = vmatprep.subr.bf16.mxu0 0
    %266 = vmatpush1.bf16.msra.mxu0 0
    %267 = vmatprep.subr.bf16.mxu0 0
    %268 = vmatpush1.bf16.msra.mxu0 0
    %269 = vmatprep.subr.bf16.mxu0 0
    %270 = vmatpush1.bf16.msra.mxu0 0
    %271 = vmatprep.subr.bf16.mxu0 0
    %272 = vmatpush1.bf16.msra.mxu0 0
    %273 = vmatprep.subr.bf16.mxu0 0
    %274 = vmatpush1.bf16.msra.mxu0 0
    %275 = vmatprep.subr.bf16.mxu0 0
    %276 = vmatpush1.bf16.msra.mxu0 0
    %277 = vmatprep.subr.bf16.mxu0 0
    %278 = vmatpush1.bf16.msra.mxu0 0
    %279 = vmatprep.subr.bf16.mxu0 0
    %280 = vmatpush1.bf16.msra.mxu0 0
    %281 = vmatprep.mubr.bf16.mxu0 0
    %282 = vmatmul.mubr.bf16.gmra.mrb[0].mxu0 %v244
    %v283 = vpop.f32.mrb[0].mxu0
    %v284 = vadd.f32 0.0, %v283
    %v285 = vpop.f32.mrb[0].mxu0
    %v286 = vpop.f32.mrb[0].mxu0
    %v287 = vpop.f32.mrb[0].mxu0
    %288 = vdwg.mxu0
    %289 = vst.msk [vmem:[#allocation8] sm:$0xff] %vm70, %v238
    %290 = vst.msk [vmem:[#allocation8 + $0x8] sm:$0xff] %vm70, %v284
    // Predicated region
    $region26: #{tpu_custom_call.1} parent=1 // pred_check
      _
    $region27: #{tpu_custom_call.1} parent=1 // pred_check_branch
      %292 = sbr.rel (0) target = $region29
    $region28: #{tpu_custom_call.1} parent=1 // pred_region
      %s294 = ssub.s32 256, 256
      %295 = vsyncadd [#allocation4], %s294
      %s296 = sshll.u32 [#allocation8], 4
      %s297 = int_to_ptr.vmem [resolvable:$true] %s296
      %302 = dma.vmem_to_hbm [thread:$0]  %s297, 256, %s3, [#allocation4], 128, 128, 8
    $region29: #{tpu_custom_call.1} parent=1 // pred_fallthru
      _
    // Predicated region
    $region30: #{tpu_custom_call.1} parent=1 // pred_check
      _
    $region31: #{tpu_custom_call.1} parent=1 // pred_check_branch
      %304 = sbr.rel (0) target = $region33
    $region32: #{tpu_custom_call.1} parent=1 // pred_region
      %s306 = ssub.s32 256, 256
      %307 = vsyncadd [#allocation10], %s306
      %s308 = sshll.u32 [#allocation9], 4
      %s309 = int_to_ptr.vmem [resolvable:$true] %s308
      %314 = dma.vmem_to_hbm [thread:$0]  %s309, 256, %s4, [#allocation10], 128, 128, 8
    $region33: #{tpu_custom_call.1} parent=1 // pred_fallthru
      _
    // Predicated region
    $region34: #{tpu_custom_call.1} parent=1 // pred_check
      _
    $region35: #{tpu_custom_call.1} parent=1 // pred_check_branch
      %316 = sbr.rel (0) target = $region37
    $region36: #{tpu_custom_call.1} parent=1 // pred_region
      %317 = dma.done [#allocation4], 256
    $region37: #{tpu_custom_call.1} parent=1 // pred_fallthru
      _
    // Predicated region
    $region38: #{tpu_custom_call.1} parent=1 // pred_check
      _
    $region39: #{tpu_custom_call.1} parent=1 // pred_check_branch
      %319 = sbr.rel (0) target = $region41
    $region40: #{tpu_custom_call.1} parent=1 // pred_region
      %320 = dma.done [#allocation10], 256
    $region41: #{tpu_custom_call.1} parent=1 // pred_fallthru
      _
    %321 = vsyncpa [#allocation3], 1
    %322 = vsyncpa [#allocation6], 1
    %323 = vsyncpa [#allocation4], 1
    %324 = vsyncpa [#allocation10], 1

// kernel: tpu_custom_call.1
$region0: #{tpu_custom_call.1}
  #allocation0 [shape = 'u32[]', space=smem, size = 0x4, offset = 0x4, fixed_abs, tag = 'smem constant byte address 0x4 - core index']
  #allocation1 [shape = 'u32[144,128]{1,0:T(1,128)}', space=vmem, size = 0x12000, scoped, tag = 'internal scratch']
  %s0 = inlined_call_operand.hbm [shape: f32[2,8,32], index: 0, kind: input, shape index: {}]
  %s1 = inlined_call_operand.hbm [shape: f32[2,8,32], index: 1, kind: input, shape index: {}]
  %s2 = inlined_call_operand.hbm [shape: f32[2,8,32], index: 2, kind: input, shape index: {}]
  %s3 = inlined_call_operand.hbm [shape: f32[2,8,32], index: 3, kind: output, shape index: {0}]
  %s4 = inlined_call_operand.hbm [shape: f32[2,8,8], index: 4, kind: output, shape index: {1}]
  %5 = xla_tuple %s3, %s4
  %s6 = sld [smem:[#allocation0]]
  $region42: #{tpu_custom_call.1} parent=0
    _
  %s8 = ssub.s32 1, %s6
  %s9 = scalar_select 0, %s8, %s6
  $region1: #{tpu_custom_call.1} parent=0
    #allocation2 [shape = 'u8[8192]{0}', space=vmem, size = 0x2000, scoped, tag = 'input window, operand 0, single buffered']
    #allocation3 [shape = 's32[1]{0}', space=sflag, size = 0x4, scoped, tag = 'scoped memory for tpu_custom_call.1']
    #allocation4 [shape = 's32[1]{0}', space=sflag, size = 0x4, scoped, tag = 'scoped memory for tpu_custom_call.1']
    #allocation5 [shape = 'u8[8192]{0}', space=vmem, size = 0x2000, scoped, tag = 'input window, operand 1, single buffered']
    #allocation6 [shape = 's32[1]{0}', space=sflag, size = 0x4, scoped, tag = 'scoped memory for tpu_custom_call.1']
    #allocation7 [shape = 'u8[8192]{0}', space=vmem, size = 0x2000, scoped, tag = 'input window, operand 2, single buffered']
    #allocation8 [shape = 'u8[8192]{0}', space=vmem, size = 0x2000, scoped, tag = 'output window, operand 0, single buffered']
    #allocation9 [shape = 'u8[8192]{0}', space=vmem, size = 0x2000, scoped, tag = 'output window, operand 1, single buffered']
    #allocation10 [shape = 's32[1]{0}', space=sflag, size = 0x4, scoped, tag = 'scoped memory for tpu_custom_call.1']
    %10 = vsyncpa [#allocation3], 0
    %11 = vsyncpa [#allocation6], 0
    %12 = vsyncpa [#allocation4], 0
    %13 = vsyncpa [#allocation10], 0
    // Predicated region
    $region2: #{tpu_custom_call.1} parent=1 // pred_check
      _
    $region3: #{tpu_custom_call.1} parent=1 // pred_check_branch
      %15 = sbr.rel (0) target = $region5
    $region4: #{tpu_custom_call.1} parent=1 // pred_region
      %s17 = ssub.s32 256, 256
      %18 = vsyncadd [#allocation3], %s17
      %s19 = sshll.u32 [#allocation2], 4
      %s20 = int_to_ptr.vmem [resolvable:$true] %s19
      %25 = dma.hbm_to_vmem [thread:$0]  %s0, 256, %s20, [#allocation3], 128, 128, 8
    $region5: #{tpu_custom_call.1} parent=1 // pred_fallthru
      _
    // Predicated region
    $region6: #{tpu_custom_call.1} parent=1 // pred_check
      _
    $region7: #{tpu_custom_call.1} parent=1 // pred_check_branch
      %27 = sbr.rel (0) target = $region9
    $region8: #{tpu_custom_call.1} parent=1 // pred_region
      %s29 = ssub.s32 256, 256
      %30 = vsyncadd [#allocation6], %s29
      %s31 = sshll.u32 [#allocation5], 4
      %s32 = int_to_ptr.vmem [resolvable:$true] %s31
      %37 = dma.hbm_to_vmem [thread:$0]  %s1, 256, %s32, [#allocation6], 128, 128, 8
    $region9: #{tpu_custom_call.1} parent=1 // pred_fallthru
      _
    // Predicated region
    $region10: #{tpu_custom_call.1} parent=1 // pred_check
      _
    $region11: #{tpu_custom_call.1} parent=1 // pred_check_branch
      %39 = sbr.rel (0) target = $region13
    $region12: #{tpu_custom_call.1} parent=1 // pred_region
      %s41 = ssub.s32 256, 256
      %42 = vsyncadd [#allocation6], %s41
      %s43 = sshll.u32 [#allocation7], 4
      %s44 = int_to_ptr.vmem [resolvable:$true] %s43
      %49 = dma.hbm_to_vmem [thread:$0]  %s2, 256, %s44, [#allocation6], 128, 128, 8
    $region13: #{tpu_custom_call.1} parent=1 // pred_fallthru
      _
    // Predicated region
    $region14: #{tpu_custom_call.1} parent=1 // pred_check
      _
    $region15: #{tpu_custom_call.1} parent=1 // pred_check_branch
      %51 = sbr.rel (0) target = $region17
    $region16: #{tpu_custom_call.1} parent=1 // pred_region
      %52 = dma.done [#allocation3], 256
    $region17: #{tpu_custom_call.1} parent=1 // pred_fallthru
      _
    // Predicated region
    $region18: #{tpu_custom_call.1} parent=1 // pred_check
      _
    $region19: #{tpu_custom_call.1} parent=1 // pred_check_branch
      %54 = sbr.rel (0) target = $region21
    $region20: #{tpu_custom_call.1} parent=1 // pred_region
      %55 = dma.done [#allocation6], 256
    $region21: #{tpu_custom_call.1} parent=1 // pred_fallthru
      _
    // Predicated region
    $region22: #{tpu_custom_call.1} parent=1 // pred_check
      _
    $region23: #{tpu_custom_call.1} parent=1 // pred_check_branch
      %57 = sbr.rel (0) target = $region25
    $region24: #{tpu_custom_call.1} parent=1 // pred_region
      %58 = dma.done [#allocation6], 256
    $region25: #{tpu_custom_call.1} parent=1 // pred_fallthru
      _
    %v60 = vld [vmem:[#allocation2] sm:$0xff]
    %v61 = vld [vmem:[#allocation2 + $0x8] sm:$0xff]
    %v62 = vmul.f32 %v60, 0.17677669
    %v63 = vmul.f32 %v61, 0.17677669
    %v64 = vpack.c.bf16 %v62, %v62
    %v65 = vpack.c.bf16 %v63, %v63
    %v66 = vld [vmem:[#allocation5] sm:$0xff]
    %v67 = vld [vmem:[#allocation5 + $0x8] sm:$0xff]
    %v68 = vpack.c.bf16 %v66, %v66
    %v69 = vpack.c.bf16 %v67, %v67
    %vm70 = vcmask 261120
    %v72 = vsel %vm70, %v64, 0
    %v75 = vsel %vm70, %v68, 0
    %77 = vmatprep.subr.bf16.mxu0 0
    %78 = vmatpush1.bf16.xpose.msra.mxu0 %v75
    %79 = vmatprep.subr.bf16.mxu0 0
    %80 = vmatpush1.bf16.xpose.msra.mxu0 0
    %81 = vmatprep.subr.bf16.mxu0 0
    %82 = vmatpush1.bf16.xpose.msra.mxu0 0
    %83 = vmatprep.subr.bf16.mxu0 0
    %84 = vmatpush1.bf16.xpose.msra.mxu0 0
    %85 = vmatprep.subr.bf16.mxu0 0
    %86 = vmatpush1.bf16.xpose.msra.mxu0 0
    %87 = vmatprep.subr.bf16.mxu0 0
    %88 = vmatpush1.bf16.xpose.msra.mxu0 0
    %89 = vmatprep.subr.bf16.mxu0 0
    %90 = vmatpush1.bf16.xpose.msra.mxu0 0
    %91 = vmatprep.subr.bf16.mxu0 0
    %92 = vmatpush1.bf16.xpose.msra.mxu0 0
    %93 = vmatprep.subr.bf16.mxu0 0
    %94 = vmatpush1.bf16.xpose.msra.mxu0 0
    %95 = vmatprep.subr.bf16.mxu0 0
    %96 = vmatpush1.bf16.xpose.msra.mxu0 0
    %97 = vmatprep.subr.bf16.mxu0 0
    %98 = vmatpush1.bf16.xpose.msra.mxu0 0
    %99 = vmatprep.subr.bf16.mxu0 0
    %100 = vmatpush1.bf16.xpose.msra.mxu0 0
    %101 = vmatprep.subr.bf16.mxu0 0
    %102 = vmatpush1.bf16.xpose.msra.mxu0 0
    %103 = vmatprep.subr.bf16.mxu0 0
    %104 = vmatpush1.bf16.xpose.msra.mxu0 0
    %105 = vmatprep.subr.bf16.mxu0 0
    %106 = vmatpush1.bf16.xpose.msra.mxu0 0
    %107 = vmatprep.subr.bf16.mxu0 0
    %108 = vmatpush1.bf16.xpose.msra.mxu0 0
    %109 = vmatprep.mubr.bf16.mxu0 0
    %110 = vmatmul.mubr.bf16.gmra.mrb[0].mxu0 %v72
    %v111 = vpop.f32.mrb[0].mxu0
    %v112 = vadd.f32 0.0, %v111
    %v113 = vpop.f32.mrb[0].mxu0
    %v114 = vpop.f32.mrb[0].mxu0
    %v115 = vpop.f32.mrb[0].mxu0
    %116 = vdwg.mxu0
    %v118 = vsel %vm70, %v65, 0
    %v121 = vsel %vm70, %v69, 0
    %123 = vmatprep.subr.bf16.mxu0 0
    %124 = vmatpush1.bf16.xpose.msra.mxu0 %v121
    %125 = vmatprep.subr.bf16.mxu0 0
    %126 = vmatpush1.bf16.xpose.msra.mxu0 0
    %127 = vmatprep.subr.bf16.mxu0 0
    %128 = vmatpush1.bf16.xpose.msra.mxu0 0
    %129 = vmatprep.subr.bf16.mxu0 0
    %130 = vmatpush1.bf16.xpose.msra.mxu0 0
    %131 = vmatprep.subr.bf16.mxu0 0
    %132 = vmatpush1.bf16.xpose.msra.mxu0 0
    %133 = vmatprep.subr.bf16.mxu0 0
    %134 = vmatpush1.bf16.xpose.msra.mxu0 0
    %135 = vmatprep.subr.bf16.mxu0 0
    %136 = vmatpush1.bf16.xpose.msra.mxu0 0
    %137 = vmatprep.subr.bf16.mxu0 0
    %138 = vmatpush1.bf16.xpose.msra.mxu0 0
    %139 = vmatprep.subr.bf16.mxu0 0
    %140 = vmatpush1.bf16.xpose.msra.mxu0 0
    %141 = vmatprep.subr.bf16.mxu0 0
    %142 = vmatpush1.bf16.xpose.msra.mxu0 0
    %143 = vmatprep.subr.bf16.mxu0 0
    %144 = vmatpush1.bf16.xpose.msra.mxu0 0
    %145 = vmatprep.subr.bf16.mxu0 0
    %146 = vmatpush1.bf16.xpose.msra.mxu0 0
    %147 = vmatprep.subr.bf16.mxu0 0
    %148 = vmatpush1.bf16.xpose.msra.mxu0 0
    %149 = vmatprep.subr.bf16.mxu0 0
    %150 = vmatpush1.bf16.xpose.msra.mxu0 0
    %151 = vmatprep.subr.bf16.mxu0 0
    %152 = vmatpush1.bf16.xpose.msra.mxu0 0
    %153 = vmatprep.subr.bf16.mxu0 0
    %154 = vmatpush1.bf16.xpose.msra.mxu0 0
    %155 = vmatprep.mubr.bf16.mxu0 0
    %156 = vmatmul.mubr.bf16.gmra.mrb[0].mxu0 %v118
    %v157 = vpop.f32.mrb[0].mxu0
    %v158 = vadd.f32 0.0, %v157
    %v159 = vpop.f32.mrb[0].mxu0
    %v160 = vpop.f32.mrb[0].mxu0
    %v161 = vpop.f32.mrb[0].mxu0
    %162 = vdwg.mxu0
    %vm163 = vcmask 64512
    %v164 = vsel %vm163, %v112, -inf
    %165 = vmax.xlane.f32.xlu0 %v164
    %v166 = vpop.xlane.xlu0 %165
    %v167 = vsel %vm163, %v158, -inf
    %168 = vmax.xlane.f32.xlu0 %v167
    %v169 = vpop.xlane.xlu0 %168
    %v170 = vsub.f32 %v112, %v166
    %v171 = vsub.f32 %v158, %v169
    %v172 = vmul.f32 %v170, 1.442695
    %v173 = vpow.pop %v172
    %v174 = vmul.f32 %v171, 1.442695
    %v175 = vpow.pop %v174
    %v176 = vsel %vm163, %v173, 0.0
    %177 = vadd.xlane.f32.xlu0 %v176
    %v178 = vpop.xlane.xlu0 %177
    %v179 = vsel %vm163, %v175, 0.0
    %180 = vadd.xlane.f32.xlu0 %v179
    %v181 = vpop.xlane.xlu0 %180
    %v182 = vrcp.pop %v178
    %v183 = vmul.f32 1.0, %v182
    %v184 = vrcp.pop %v181
    %v185 = vmul.f32 1.0, %v184
    %v186 = vmul.f32 %v173, %v183
    %v187 = vmul.f32 %v175, %v185
    %188 = vst.msk [vmem:[#allocation9] sm:$0xff] %vm163, %v186
    %189 = vst.msk [vmem:[#allocation9 + $0x8] sm:$0xff] %vm163, %v187
    %v190 = vld [vmem:[#allocation7] sm:$0xff]
    %v191 = vld [vmem:[#allocation7 + $0x8] sm:$0xff]
    %v192 = vpack.c.bf16 %v190, %v190
    %v193 = vpack.c.bf16 %v191, %v191
    %v194 = vpack.c.bf16 %v186, %v186
    %v195 = vpack.c.bf16 %v187, %v187
    %v197 = vsel %vm163, %v194, 0
    %vm199 = vcmask 1043456
    %v201 = vsel %vm199, %v192, 0
    %203 = vmatprep.subr.bf16.mxu0 0
    %204 = vmatpush1.bf16.msra.mxu0 %v201
    %205 = vmatprep.subr.bf16.mxu0 0
    %206 = vmatpush1.bf16.msra.mxu0 0
    %207 = vmatprep.subr.bf16.mxu0 0
    %208 = vmatpush1.bf16.msra.mxu0 0
    %209 = vmatprep.subr.bf16.mxu0 0
    %210 = vmatpush1.bf16.msra.mxu0 0
    %211 = vmatprep.subr.bf16.mxu0 0
    %212 = vmatpush1.bf16.msra.mxu0 0
    %213 = vmatprep.subr.bf16.mxu0 0
    %214 = vmatpush1.bf16.msra.mxu0 0
    %215 = vmatprep.subr.bf16.mxu0 0
    %216 = vmatpush1.bf16.msra.mxu0 0
    %217 = vmatprep.subr.bf16.mxu0 0
    %218 = vmatpush1.bf16.msra.mxu0 0
    %219 = vmatprep.subr.bf16.mxu0 0
    %220 = vmatpush1.bf16.msra.mxu0 0
    %221 = vmatprep.subr.bf16.mxu0 0
    %222 = vmatpush1.bf16.msra.mxu0 0
    %223 = vmatprep.subr.bf16.mxu0 0
    %224 = vmatpush1.bf16.msra.mxu0 0
    %225 = vmatprep.subr.bf16.mxu0 0
    %226 = vmatpush1.bf16.msra.mxu0 0
    %227 = vmatprep.subr.bf16.mxu0 0
    %228 = vmatpush1.bf16.msra.mxu0 0
    %229 = vmatprep.subr.bf16.mxu0 0
    %230 = vmatpush1.bf16.msra.mxu0 0
    %231 = vmatprep.subr.bf16.mxu0 0
    %232 = vmatpush1.bf16.msra.mxu0 0
    %233 = vmatprep.subr.bf16.mxu0 0
    %234 = vmatpush1.bf16.msra.mxu0 0
    %235 = vmatprep.mubr.bf16.mxu0 0
    %236 = vmatmul.mubr.bf16.gmra.mrb[0].mxu0 %v197
    %v237 = vpop.f32.mrb[0].mxu0
    %v238 = vadd.f32 0.0, %v237
    %v239 = vpop.f32.mrb[0].mxu0
    %v240 = vpop.f32.mrb[0].mxu0
    %v241 = vpop.f32.mrb[0].mxu0
    %242 = vdwg.mxu0
    %v244 = vsel %vm163, %v195, 0
    %v247 = vsel %vm199, %v193, 0
    %249 = vmatprep.subr.bf16.mxu0 0
    %250 = vmatpush1.bf16.msra.mxu0 %v247
    %251 = vmatprep.subr.bf16.mxu0 0
    %252 = vmatpush1.bf16.msra.mxu0 0
    %253 = vmatprep.subr.bf16.mxu0 0
    %254 = vmatpush1.bf16.msra.mxu0 0
    %255 = vmatprep.subr.bf16.mxu0 0
    %256 = vmatpush1.bf16.msra.mxu0 0
    %257 = vmatprep.subr.bf16.mxu0 0
    %258 = vmatpush1.bf16.msra.mxu0 0
    %259 = vmatprep.subr.bf16.mxu0 0
    %260 = vmatpush1.bf16.msra.mxu0 0
    %261 = vmatprep.subr.bf16.mxu0 0
    %262 = vmatpush1.bf16.msra.mxu0 0
    %263 = vmatprep.subr.bf16.mxu0 0
    %264 = vmatpush1.bf16.msra.mxu0 0
    %265 = vmatprep.subr.bf16.mxu0 0
    %266 = vmatpush1.bf16.msra.mxu0 0
    %267 = vmatprep.subr.bf16.mxu0 0
    %268 = vmatpush1.bf16.msra.mxu0 0
    %269 = vmatprep.subr.bf16.mxu0 0
    %270 = vmatpush1.bf16.msra.mxu0 0
    %271 = vmatprep.subr.bf16.mxu0 0
    %272 = vmatpush1.bf16.msra.mxu0 0
    %273 = vmatprep.subr.bf16.mxu0 0
    %274 = vmatpush1.bf16.msra.mxu0 0
    %275 = vmatprep.subr.bf16.mxu0 0
    %276 = vmatpush1.bf16.msra.mxu0 0
    %277 = vmatprep.subr.bf16.mxu0 0
    %278 = vmatpush1.bf16.msra.mxu0 0
    %279 = vmatprep.subr.bf16.mxu0 0
    %280 = vmatpush1.bf16.msra.mxu0 0
    %281 = vmatprep.mubr.bf16.mxu0 0
    %282 = vmatmul.mubr.bf16.gmra.mrb[0].mxu0 %v244
    %v283 = vpop.f32.mrb[0].mxu0
    %v284 = vadd.f32 0.0, %v283
    %v285 = vpop.f32.mrb[0].mxu0
    %v286 = vpop.f32.mrb[0].mxu0
    %v287 = vpop.f32.mrb[0].mxu0
    %288 = vdwg.mxu0
    %289 = vst.msk [vmem:[#allocation8] sm:$0xff] %vm70, %v238
    %290 = vst.msk [vmem:[#allocation8 + $0x8] sm:$0xff] %vm70, %v284
    // Predicated region
    $region26: #{tpu_custom_call.1} parent=1 // pred_check
      _
    $region27: #{tpu_custom_call.1} parent=1 // pred_check_branch
      %292 = sbr.rel (0) target = $region29
    $region28: #{tpu_custom_call.1} parent=1 // pred_region
      %s294 = ssub.s32 256, 256
      %295 = vsyncadd [#allocation4], %s294
      %s296 = sshll.u32 [#allocation8], 4
      %s297 = int_to_ptr.vmem [resolvable:$true] %s296
      %302 = dma.vmem_to_hbm [thread:$0]  %s297, 256, %s3, [#allocation4], 128, 128, 8
    $region29: #{tpu_custom_call.1} parent=1 // pred_fallthru
      _
    // Predicated region
    $region30: #{tpu_custom_call.1} parent=1 // pred_check
      _
    $region31: #{tpu_custom_call.1} parent=1 // pred_check_branch
      %304 = sbr.rel (0) target = $region33
    $region32: #{tpu_custom_call.1} parent=1 // pred_region
      %s306 = ssub.s32 256, 256
      %307 = vsyncadd [#allocation10], %s306
      %s308 = sshll.u32 [#allocation9], 4
      %s309 = int_to_ptr.vmem [resolvable:$true] %s308
      %314 = dma.vmem_to_hbm [thread:$0]  %s309, 256, %s4, [#allocation10], 128, 128, 8
    $region33: #{tpu_custom_call.1} parent=1 // pred_fallthru
      _
    // Predicated region
    $region34: #{tpu_custom_call.1} parent=1 // pred_check
      _
    $region35: #{tpu_custom_call.1} parent=1 // pred_check_branch
      %316 = sbr.rel (0) target = $region37
    $region36: #{tpu_custom_call.1} parent=1 // pred_region
      %317 = dma.done [#allocation4], 256
    $region37: #{tpu_custom_call.1} parent=1 // pred_fallthru
      _
    // Predicated region
    $region38: #{tpu_custom_call.1} parent=1 // pred_check
      _
    $region39: #{tpu_custom_call.1} parent=1 // pred_check_branch
      %319 = sbr.rel (0) target = $region41
    $region40: #{tpu_custom_call.1} parent=1 // pred_region
      %320 = dma.done [#allocation10], 256
    $region41: #{tpu_custom_call.1} parent=1 // pred_fallthru
      _
    %321 = vsyncpa [#allocation3], 1
    %322 = vsyncpa [#allocation6], 1
    %323 = vsyncpa [#allocation4], 1
    %324 = vsyncpa [#allocation10], 1

</llo_original>
